<compile_context>
chip_gen: v7x
topology: tpu7x:2x2x1
jax: 0.10.0
libtpu: 0.0.40
codegen_flags: <defaults>
</compile_context>

<pallas_src>
import jax
import jax.numpy as jnp
from jax.experimental import pallas as pl
from jax.experimental.pallas import tpu as pltpu


def spatial_attention_kernel(x_ref, w_ref, b_ref, o_ref):
    # x_ref: (C, TL)   w_ref: (C, 1)   b_ref: (1, 1)   o_ref: (C, TL)
    x = x_ref[...].astype(jnp.float32)                  # cast once, reuse
    w = w_ref[...]                                      # (C, 1) f32
    b = b_ref[0, 0]                                     # scalar f32
    # 1x1 conv: VPU multiply + sublane (XLU) reduction over channels.
    act = jnp.sum(x * w, axis=0, keepdims=True) + b     # (1, TL)
    # broadcast-multiply over the channel axis
    o_ref[...] = (x * act).astype(o_ref.dtype)


def spatial_attention(x, weight, bias, *, lane_tile=2048):
    """x: (N, C, H, W), weight: (C,), bias: scalar -> (N, C, H, W)."""
    N, C, H, W = x.shape
    HW = H * W

    # Lane tile: multiple of 128, capped at `lane_tile`, sized to keep each
    # double-buffered in+out stage a few MiB at most (fits v7x 64 MiB VMEM).
    TL = min(lane_tile, pl.cdiv(HW, 128) * 128)
    HW_pad = pl.cdiv(HW, TL) * TL

    x_flat = x.reshape(N, C, HW)
    if HW_pad != HW:
        # zero padding -> padded outputs are zero, sliced off below
        x_flat = jnp.pad(x_flat, ((0, 0), (0, 0), (0, HW_pad - HW)))

    w_col = weight.reshape(C, 1).astype(jnp.float32)
    b2d = jnp.asarray(bias, jnp.float32).reshape(1, 1)

    dtype_size = jnp.dtype(x.dtype).itemsize
    cost = pl.CostEstimate(
        flops=3 * N * C * HW,               # reduce-mul, reduce-add, bcast-mul
        transcendentals=0,
        bytes_accessed=2 * N * C * HW * dtype_size,
    )

    out_flat = pl.pallas_call(
        spatial_attention_kernel,
        out_shape=jax.ShapeDtypeStruct((N, C, HW_pad), x.dtype),
        grid=(N, HW_pad // TL),
        in_specs=[
            pl.BlockSpec((pl.Squeezed(), C, TL), lambda n, s: (n, 0, s)),
            pl.BlockSpec((C, 1), lambda n, s: (0, 0)),
            pl.BlockSpec((1, 1), lambda n, s: (0, 0)),
        ],
        out_specs=pl.BlockSpec((pl.Squeezed(), C, TL), lambda n, s: (n, 0, s)),
        compiler_params=pltpu.CompilerParams(
            dimension_semantics=("parallel", "parallel")),
        cost_estimate=cost,
    )(x_flat, w_col, b2d)

    if HW_pad != HW:
        out_flat = out_flat[:, :, :HW]
    return out_flat.reshape(N, C, H, W)


def spatial_attention_ref(x, weight, bias):
    # Pure-JAX reference of the PyTorch forward.
    act = jnp.einsum("nchw,c->nhw", x, weight) + bias   # (N, H, W)
    return x * act[:, None, :, :]


if __name__ == "__main__":
    key = jax.random.PRNGKey(0)
    k_x, k_w, k_b = jax.random.split(key, 3)

    N, C, H, W = 2, 4, 16, 16
    x = jax.random.normal(k_x, (N, C, H, W), dtype=jnp.float32)

    # Deterministic "Conv2d(C, 1, 1)" parameters (kaiming-uniform-ish range).
    bound = 1.0 / (C ** 0.5)
    weight = jax.random.uniform(k_w, (C,), jnp.float32, -bound, bound)
    bias = jax.random.uniform(k_b, (), jnp.float32, -bound, bound)

    out = spatial_attention(x, weight, bias)
    out = jax.block_until_ready(out)

    ref = spatial_attention_ref(x, weight, bias)
    assert out.shape == (N, C, H, W)
    assert jnp.allclose(out, ref, atol=1e-5, rtol=1e-5)

    print("KERNEL_OK")
</pallas_src>

<mosaic_0001>
module attributes {stable_mosaic.version = 11 : i64} {
  func.func @spatial_attention_kernel(%arg0: i32, %arg1: i32, %arg2: memref<1x4x256xf32, #tpu.memory_space<vmem>>, %arg3: memref<4x1xf32, #tpu.memory_space<vmem>>, %arg4: memref<1x1xf32, #tpu.memory_space<vmem>>, %arg5: memref<1x4x256xf32, #tpu.memory_space<vmem>>) attributes {dimension_semantics = [#tpu.dimension_semantics<parallel>, #tpu.dimension_semantics<parallel>], iteration_bounds = array<i64: 2, 1>, scalar_prefetch = 0 : i64, scratch_operands = 0 : i64, tpu.core_type = #tpu.core_type<tc>, window_params = [{transform_indices = @transform_0, window_bounds = array<i64: 1, 4, 256>}, {pipeline_mode = #tpu.pipeline_mode<synchronous>, transform_indices = @transform_1, window_bounds = array<i64: 4, 1>}, {pipeline_mode = #tpu.pipeline_mode<synchronous>, transform_indices = @transform_2, window_bounds = array<i64: 1, 1>}, {transform_indices = @transform_3, window_bounds = array<i64: 1, 4, 256>}]} {
    %c0 = arith.constant 0 : index
    %c0_0 = arith.constant 0 : index
    %c0_1 = arith.constant 0 : index
    %0 = vector.load %arg2[%c0, %c0_0, %c0_1] : memref<1x4x256xf32, #tpu.memory_space<vmem>>, vector<1x4x256xf32>
    %1 = vector.shape_cast %0 : vector<1x4x256xf32> to vector<4x256xf32>
    %c0_2 = arith.constant 0 : index
    %c0_3 = arith.constant 0 : index
    %2 = vector.load %arg3[%c0_2, %c0_3] : memref<4x1xf32, #tpu.memory_space<vmem>>, vector<4x1xf32>
    %c0_4 = arith.constant 0 : index
    %c0_5 = arith.constant 0 : index
    %3 = vector.load %arg4[%c0_4, %c0_5] : memref<1x1xf32, #tpu.memory_space<vmem>>, vector<1x1xf32>
    %4 = vector.extract %3[0, 0] : f32 from vector<1x1xf32>
    %5 = vector.broadcast %2 : vector<4x1xf32> to vector<4x256xf32>
    %6 = arith.mulf %1, %5 : vector<4x256xf32>
    %cst = arith.constant dense<0.000000e+00> : vector<256xf32>
    %7 = vector.multi_reduction <add>, %6, %cst [0] : vector<4x256xf32> to vector<256xf32>
    %8 = vector.shape_cast %7 : vector<256xf32> to vector<1x256xf32>
    %9 = vector.broadcast %4 : f32 to vector<1x256xf32>
    %10 = arith.addf %8, %9 : vector<1x256xf32>
    %11 = vector.broadcast %10 : vector<1x256xf32> to vector<4x256xf32>
    %12 = arith.mulf %1, %11 : vector<4x256xf32>
    %c0_6 = arith.constant 0 : index
    %c0_7 = arith.constant 0 : index
    %c0_8 = arith.constant 0 : index
    %13 = vector.load %arg5[%c0_6, %c0_7, %c0_8] : memref<1x4x256xf32, #tpu.memory_space<vmem>>, vector<1x4x256xf32>
    %14 = vector.shape_cast %13 : vector<1x4x256xf32> to vector<4x256xf32>
    %15 = vector.shape_cast %12 : vector<4x256xf32> to vector<1x4x256xf32>
    tpu.vector_store %arg5[%c0_6, %c0_7, %c0_8], %15 {strides = array<i32>} : memref<1x4x256xf32, #tpu.memory_space<vmem>>, vector<1x4x256xf32>,
    return
  }
  func.func @transform_0(%arg0: i32, %arg1: i32) -> (i32, i32, i32) {
    %c0_i32 = arith.constant 0 : i32
    %c0_i32_0 = arith.constant 0 : i32
    return %arg0, %c0_i32, %arg1 : i32, i32, i32
  }
  func.func @transform_1(%arg0: i32, %arg1: i32) -> (i32, i32) {
    %c0_i32 = arith.constant 0 : i32
    %c0_i32_0 = arith.constant 0 : i32
    %c0_i32_1 = arith.constant 0 : i32
    return %c0_i32, %c0_i32_0 : i32, i32
  }
  func.func @transform_2(%arg0: i32, %arg1: i32) -> (i32, i32) {
    %c0_i32 = arith.constant 0 : i32
    %c0_i32_0 = arith.constant 0 : i32
    %c0_i32_1 = arith.constant 0 : i32
    return %c0_i32, %c0_i32_0 : i32, i32
  }
  func.func @transform_3(%arg0: i32, %arg1: i32) -> (i32, i32, i32) {
    %c0_i32 = arith.constant 0 : i32
    %c0_i32_0 = arith.constant 0 : i32
    return %arg0, %c0_i32, %arg1 : i32, i32, i32
  }
}

</mosaic_0001>

<llo_original>
// kernel: tpu_custom_call.1
$region0: #{tpu_custom_call.1}
  #allocation0 [shape = 'u32[]', space=smem, size = 0x4, offset = 0x4, fixed_abs, tag = 'smem constant byte address 0x4 - core index']
  #allocation1 [shape = 'u32[144,128]{1,0:T(1,128)}', space=vmem, size = 0x12000, scoped, tag = 'internal scratch']
  #allocation2 [shape = 'f32[1,1]{1,0:T(1,128)S(1)}', space=vmem, size = 0x200, scoped, tag = 'scoped memory for tpu_custom_call.1']
  %s0 = inlined_call_operand.hbm [shape: f32[2,4,256], index: 0, kind: input, shape index: {}]
  %s1 = inlined_call_operand.vmem [shape: f32[4,1], index: 1, kind: input, shape index: {}]
  %s2 = inlined_call_operand.<no memory space> [shape: f32[1,1], index: 2, kind: input, shape index: {}]
  %s3 = inlined_call_operand.hbm [shape: f32[2,4,256], index: 3, kind: output, shape index: {}]
  %s4 = sld [smem:[#allocation0]]
  $region49: #{tpu_custom_call.1} parent=0
    _
  %s6 = ssub.s32 1, %s4
  %s7 = scalar_select 0, %s6, %s4
  %v8 = vstv %s2
  %9 = vst [vmem:[#allocation2] sm:$0x1] %v8
  $region1: #{tpu_custom_call.1} parent=0
    #allocation3 [shape = 'u8[8192]{0}', space=vmem, size = 0x2000, scoped, tag = 'input window, operand 0']
    #allocation4 [shape = 's32[2]{0}', space=sflag, size = 0x8, scoped, tag = 'scoped memory for tpu_custom_call.1']
    #allocation5 [shape = 's32[2]{0}', space=sflag, size = 0x8, scoped, tag = 'scoped memory for tpu_custom_call.1']
    #allocation6 [shape = 'u8[8192]{0}', space=vmem, size = 0x2000, scoped, tag = 'output window, operand 0']
    %10 = vsyncpa [#allocation4], 0
    %s11 = scalar_lea.sflag [#allocation4], 1
    %12 = vsyncpa %s11, 0
    %13 = vsyncpa [#allocation5], 0
    %s14 = scalar_lea.sflag [#allocation5], 1
    %15 = vsyncpa %s14, 0
    loop: start=0, step=1, limit=4
    $region2: #{tpu_custom_call.1} parent=1 // loop_pre_header
      _
    $region3: #{tpu_custom_call.1} parent=1 // loop_header
      %s17 = sphi 0, %s21
      %p18 = scmp.ge.s32.totalorder %s17, 4
      %s24 = sphi 0, %s36
      %s25 = sphi 0, %s32
      %s26 = sphi 0, %s24
      %s27 = sphi 0, %s25
      %s28 = sphi 0, %s26
      %s29 = sphi 0, %s27
      %s41 = sphi 0, %s43
      %s44 = sphi 0, %s41
      %s45 = sphi 0, %s44
      %s61 = sphi 0, %s45
      %s65 = sphi 0, %s65
      %s67 = sphi 0, %s65
      %s68 = sphi 0, %s67
      %s82 = sphi 0, %s68
      %s86 = sphi 0, %s86
      %s88 = sphi 0, %s86
      %s89 = sphi 0, %s88
      %s103 = sphi 0, %s89
      %s111 = sphi 0, %s113
      %s114 = sphi 0, %s111
      %s115 = sphi 0, %s114
      %s131 = sphi 0, %s115
    $region4: #{tpu_custom_call.1} parent=1 // loop_header_branch
      %20 = sbr.rel (%p18) target = $region8
    $region5: #{tpu_custom_call.1} parent=1 // loop_body
      %s22 = ssub.s32 %s17, 1
      %s23 = ssub.s32 %s17, 2
      %s30 = sadd.s32 1, %s25
      %p31 = scmp.ge.s32.totalorder %s30, 1
      %s32 = scalar_select %p31, 0, %s30
      %s33 = sadd.s32 1, %s24
      %s34 = scalar_select %p31, %s33, %s24
      %p35 = scmp.ge.s32.totalorder %s34, 2
      %s36 = scalar_select %p35, 0, %s34
      %s37 = ssub.s32 %s24, %s36
      %s38 = ssub.s32 %s25, %s32
      %s39 = sor.u32 %s37, %s38
      %p40 = scmp.eq.s32.totalorder %s39, 0
      %s42 = sadd.s32 %s41, 1
      %s43 = scalar_select %p40, %s41, %s42
      %p46 = pneg %p40
      %p47 = scmp.eq.s32.totalorder %s17, 1
      %p48 = por %p46, %p47
      %p49 = scmp.ne.s32.totalorder %s41, %s44
      %p50 = scmp.eq.s32.totalorder %s17, 0
      %p51 = por %p49, %p50
      %p52 = scmp.ne.s32.totalorder %s41, %s44
      %p53 = scmp.eq.s32.totalorder %s22, 1
      %p54 = por %p52, %p53
      %p55 = scmp.ne.s32.totalorder %s44, %s45
      %p56 = scmp.eq.s32.totalorder %s22, 0
      %p57 = por %p55, %p56
      %p58 = scmp.ne.s32.totalorder %s44, %s45
      %p59 = scmp.eq.s32.totalorder %s23, 1
      %p60 = por %p58, %p59
      %p62 = scmp.ne.s32.totalorder %s45, %s61
      %p63 = scmp.eq.s32.totalorder %s23, 0
      %p64 = por %p62, %p63
      %s66 = sadd.s32 %s65, 1
      %p69 = scmp.eq.s32.totalorder %s17, 1
      %p70 = scmp.ne.s32.totalorder %s65, %s67
      %p71 = scmp.eq.s32.totalorder %s17, 0
      %p72 = por %p70, %p71
      %p73 = scmp.ne.s32.totalorder %s65, %s67
      %p74 = scmp.eq.s32.totalorder %s22, 1
      %p75 = por %p73, %p74
      %p76 = scmp.ne.s32.totalorder %s67, %s68
      %p77 = scmp.eq.s32.totalorder %s22, 0
      %p78 = por %p76, %p77
      %p79 = scmp.ne.s32.totalorder %s67, %s68
      %p80 = scmp.eq.s32.totalorder %s23, 1
      %p81 = por %p79, %p80
      %p83 = scmp.ne.s32.totalorder %s68, %s82
      %p84 = scmp.eq.s32.totalorder %s23, 0
      %p85 = por %p83, %p84
      %s87 = sadd.s32 %s86, 1
      %p90 = scmp.eq.s32.totalorder %s17, 1
      %p91 = scmp.ne.s32.totalorder %s86, %s88
      %p92 = scmp.eq.s32.totalorder %s17, 0
      %p93 = por %p91, %p92
      %p94 = scmp.ne.s32.totalorder %s86, %s88
      %p95 = scmp.eq.s32.totalorder %s22, 1
      %p96 = por %p94, %p95
      %p97 = scmp.ne.s32.totalorder %s88, %s89
      %p98 = scmp.eq.s32.totalorder %s22, 0
      %p99 = por %p97, %p98
      %p100 = scmp.ne.s32.totalorder %s88, %s89
      %p101 = scmp.eq.s32.totalorder %s23, 1
      %p102 = por %p100, %p101
      %p104 = scmp.ne.s32.totalorder %s89, %s103
      %p105 = scmp.eq.s32.totalorder %s23, 0
      %p106 = por %p104, %p105
      %s107 = ssub.s32 %s24, %s36
      %s108 = ssub.s32 %s25, %s32
      %s109 = sor.u32 %s107, %s108
      %p110 = scmp.eq.s32.totalorder %s109, 0
      %s112 = sadd.s32 %s111, 1
      %s113 = scalar_select %p110, %s111, %s112
      %p116 = pneg %p110
      %p117 = scmp.eq.s32.totalorder %s17, 1
      %p118 = por %p116, %p117
      %p119 = scmp.ne.s32.totalorder %s111, %s114
      %p120 = scmp.eq.s32.totalorder %s17, 0
      %p121 = por %p119, %p120
      %p122 = scmp.ne.s32.totalorder %s111, %s114
      %p123 = scmp.eq.s32.totalorder %s22, 1
      %p124 = por %p122, %p123
      %p125 = scmp.ne.s32.totalorder %s114, %s115
      %p126 = scmp.eq.s32.totalorder %s22, 0
      %p127 = por %p125, %p126
      %p128 = scmp.ne.s32.totalorder %s114, %s115
      %p129 = scmp.eq.s32.totalorder %s23, 1
      %p130 = por %p128, %p129
      %p132 = scmp.ne.s32.totalorder %s115, %s131
      %p133 = scmp.eq.s32.totalorder %s23, 0
      %p134 = por %p132, %p133
      %p135 = scmp.le.s32.totalorder 1, %s17
      %p136 = scmp.lt.s32.totalorder %s17, 3
      %p137 = pnand %p135, %p136
      %p138 = pneg %p137
      // Predicated region
      $region9: #{tpu_custom_call.1} parent=5 // pred_check
        _
      $region10: #{tpu_custom_call.1} parent=5 // pred_check_branch
        %140 = sbr.rel (%p137) target = $region12
      $region11: #{tpu_custom_call.1} parent=5 // pred_region
        %s141 = ssub.s32 %s17, 1
        // Predicated region
        $region13: #{tpu_custom_call.1} parent=11 // pred_check
          %p142 = pneg %p78
        $region14: #{tpu_custom_call.1} parent=11 // pred_check_branch
          %144 = sbr.rel (%p142) target = $region16
        $region15: #{tpu_custom_call.1} parent=11 // pred_region
          _
        $region16: #{tpu_custom_call.1} parent=11 // pred_fallthru
          _
        // Predicated region
        $region17: #{tpu_custom_call.1} parent=11 // pred_check
          %p145 = pneg %p99
        $region18: #{tpu_custom_call.1} parent=11 // pred_check_branch
          %147 = sbr.rel (%p145) target = $region20
        $region19: #{tpu_custom_call.1} parent=11 // pred_region
          _
        $region20: #{tpu_custom_call.1} parent=11 // pred_fallthru
          _
      $region12: #{tpu_custom_call.1} parent=5 // pred_fallthru
        _
      %p148 = scmp.lt.s32.totalorder %s17, 2
      // Predicated region
      $region21: #{tpu_custom_call.1} parent=5 // pred_check
        %p149 = pneg %p148
      $region22: #{tpu_custom_call.1} parent=5 // pred_check_branch
        %151 = sbr.rel (%p149) target = $region24
      $region23: #{tpu_custom_call.1} parent=5 // pred_region
        // Predicated region
        $region25: #{tpu_custom_call.1} parent=23 // pred_check
          %p152 = pneg %p51
        $region26: #{tpu_custom_call.1} parent=23 // pred_check_branch
          %154 = sbr.rel (%p152) target = $region28
        $region27: #{tpu_custom_call.1} parent=23 // pred_region
          %s155 = sand.u32 %s41, 1
          %s156 = scalar_lea.sflag [#allocation4], %s155
          %s157 = sand.u32 %s41, 1
          %s158 = smul.addr %s157, 8
          %s159 = scalar_lea.vmem [#allocation3], %s158
          %s160 = smul.u32 2, %s25
          %s162 = ssub.s32 128, 128
          %163 = vsyncadd %s156, %s162
          %s164 = smul.addr %s24, 2
          %s165 = sadd.s32 %s160, %s164
          %s166 = smul.addr %s165, 64
          %s167 = scalar_lea.hbm %s0, %s166
          %s169 = sshll.u32 %s159, 4
          %s170 = int_to_ptr.vmem [resolvable:$true] %s169
          %172 = dma.hbm_to_vmem [thread:$0]  %s167, 128, %s170, %s156
        $region28: #{tpu_custom_call.1} parent=23 // pred_fallthru
          _
      $region24: #{tpu_custom_call.1} parent=5 // pred_fallthru
        _
      %p173 = scmp.le.s32.totalorder 1, %s17
      %p174 = scmp.lt.s32.totalorder %s17, 3
      %p175 = pnand %p173, %p174
      %p176 = pneg %p175
      // Predicated region
      $region29: #{tpu_custom_call.1} parent=5 // pred_check
        _
      $region30: #{tpu_custom_call.1} parent=5 // pred_check_branch
        %178 = sbr.rel (%p175) target = $region32
      $region31: #{tpu_custom_call.1} parent=5 // pred_region
        %s179 = ssub.s32 %s17, 1
        %s180 = sand.u32 %s44, 1
        %s181 = scalar_lea.sflag [#allocation4], %s180
        %s182 = sand.u32 %s44, 1
        %s183 = smul.addr %s182, 8
        %s184 = scalar_lea.vmem [#allocation3], %s183
        // Predicated region
        $region33: #{tpu_custom_call.1} parent=31 // pred_check
          %p185 = pneg %p57
        $region34: #{tpu_custom_call.1} parent=31 // pred_check_branch
          %187 = sbr.rel (%p185) target = $region36
        $region35: #{tpu_custom_call.1} parent=31 // pred_region
          %188 = dma.done %s181, 128
        $region36: #{tpu_custom_call.1} parent=31 // pred_fallthru
          _
        %s189 = sand.u32 %s44, 1
        %s190 = scalar_lea.sflag [#allocation4], %s189
        %s191 = sand.u32 %s44, 1
        %s192 = smul.addr %s191, 8
        %s193 = scalar_lea.vmem [#allocation3], %s192
        %p194 = pneg %p57
        %p195 = pneg %p54
        %p196 = pneg %p78
        %p197 = pneg %p75
        %p198 = pneg %p99
        %p199 = pneg %p96
        %p200 = pneg %p127
        %p201 = pneg %p124
        %s202 = sand.u32 %s114, 1
        %s203 = scalar_lea.sflag [#allocation5], %s202
        %s204 = sand.u32 %s114, 1
        %s205 = smul.addr %s204, 8
        %s206 = scalar_lea.vmem [#allocation6], %s205
        %s207 = smul.u32 2, %s27
        %s208 = smul.u32 2, %s27
        %v209 = vld [vmem:[%s184] sm:$0xff]
        %v210 = vld [vmem:[%s1] sm:$0xf]
        %v211 = vld [vmem:[#allocation2] sm:$0x1]
        %s212 = vtos %v211
        %214 = vset.pattern.permute.xlu0 0
        %215 = vperm.xlu0 %214, %v210
        %v216 = vpop.permute.xlu0 %215
        %v218 = vunpack.c.l.s4 839922192
        %v219 = vunpack.c.0.s8 %v218
        %v220 = vlaneseq
        %v221 = vshrl.u32 %v220, 7
        %v222 = vsub.s32 %v219, %v221
        %v223 = vrot.slane %v216, %v222
        %v225 = vmul.f32 %v209, %v223
        %v227 = vcombine.high %v225, %v225
        %vm229 = vcmask 1043456
        %v230 = vsel %vm229, %v225, 0.0
        %v231 = vrot.slane %v230, 4
        %v232 = vadd.f32 %v230, %v231
        %v233 = vrot.slane %v232, 2
        %v234 = vadd.f32 %v232, %v233
        %v235 = vrot.slane %v234, 1
        %v236 = vadd.f32 %v234, %v235
        %v237 = vsel %vm229, %v227, 0.0
        %v238 = vrot.slane %v237, 4
        %v239 = vadd.f32 %v237, %v238
        %v240 = vrot.slane %v239, 2
        %v241 = vadd.f32 %v239, %v240
        %v242 = vrot.slane %v241, 1
        %v243 = vadd.f32 %v241, %v242
        %v244 = vstv %s212
        %v245 = vadd.f32 %v236, %v244
        %v246 = vadd.f32 %v243, %v244
        %v249 = vcombine.low %v245, %v246
        %v251 = vmul.f32 %v209, %v249
        %252 = vst [vmem:[%s206] sm:$0xff] %v251
        %s253 = sand.u32 %s114, 1
        %s254 = scalar_lea.sflag [#allocation5], %s253
        %s255 = sand.u32 %s114, 1
        %s256 = smul.addr %s255, 8
        %s257 = scalar_lea.vmem [#allocation6], %s256
        // Predicated region
        $region37: #{tpu_custom_call.1} parent=31 // pred_check
          %p258 = pneg %p124
        $region38: #{tpu_custom_call.1} parent=31 // pred_check_branch
          %260 = sbr.rel (%p258) target = $region40
        $region39: #{tpu_custom_call.1} parent=31 // pred_region
          %s261 = smul.u32 2, %s27
          %s263 = ssub.s32 128, 128
          %264 = vsyncadd %s254, %s263
          %s265 = smul.addr %s26, 2
          %s266 = sadd.s32 %s261, %s265
          %s267 = smul.addr %s266, 64
          %s268 = scalar_lea.hbm %s3, %s267
          %s270 = sshll.u32 %s257, 4
          %s271 = int_to_ptr.vmem [resolvable:$true] %s270
          %273 = dma.vmem_to_hbm [thread:$0]  %s271, 128, %s268, %s254
        $region40: #{tpu_custom_call.1} parent=31 // pred_fallthru
          _
      $region32: #{tpu_custom_call.1} parent=5 // pred_fallthru
        _
      %p274 = scmp.le.s32.totalorder 2, %s17
      // Predicated region
      $region41: #{tpu_custom_call.1} parent=5 // pred_check
        %p275 = pneg %p274
      $region42: #{tpu_custom_call.1} parent=5 // pred_check_branch
        %277 = sbr.rel (%p275) target = $region44
      $region43: #{tpu_custom_call.1} parent=5 // pred_region
        %s278 = ssub.s32 %s17, 2
        // Predicated region
        $region45: #{tpu_custom_call.1} parent=43 // pred_check
          %p279 = pneg %p130
        $region46: #{tpu_custom_call.1} parent=43 // pred_check_branch
          %281 = sbr.rel (%p279) target = $region48
        $region47: #{tpu_custom_call.1} parent=43 // pred_region
          %s282 = sand.u32 %s115, 1
          %s283 = scalar_lea.sflag [#allocation5], %s282
          %s284 = sand.u32 %s115, 1
          %s285 = smul.addr %s284, 8
          %s286 = scalar_lea.vmem [#allocation6], %s285
          %287 = dma.done %s283, 128
        $region48: #{tpu_custom_call.1} parent=43 // pred_fallthru
          _
      $region44: #{tpu_custom_call.1} parent=5 // pred_fallthru
        _
    $region6: #{tpu_custom_call.1} parent=1 // loop_footer
      %s21 = sadd.s32 1, %s17
    $region7: #{tpu_custom_call.1} parent=1 // loop_footer_branch
      %16 = sbr.rel target = $region3
    $region8: #{tpu_custom_call.1} parent=1 // loop_exit
      _
    %288 = vsyncpa [#allocation4], 1
    %s289 = scalar_lea.sflag [#allocation4], 1
    %290 = vsyncpa %s289, 1
    %291 = vsyncpa [#allocation5], 1
    %s292 = scalar_lea.sflag [#allocation5], 1
    %293 = vsyncpa %s292, 1

</llo_original>
